<compile_context>
chip_gen: v5e
topology: v5e:2x2
jax: 0.10.0
libtpu: 0.0.40
codegen_flags: <defaults>
</compile_context>

<pallas_src>
import functools

import jax
import jax.numpy as jnp
from jax.experimental import pallas as pl
from jax.experimental.pallas import tpu as pltpu


def _sigmoid_mf_kernel(a_ref, b_ref, c_ref, x_ref, o_ref, *, approx_recip):
    a = a_ref[0]
    b = b_ref[0]
    c = c_ref[0]
    t = x_ref[...].astype(jnp.float32) + c
    e = jnp.exp(t)                                   # exp(x + c)
    num = a * jnp.exp(b * t)                         # a * exp(x+c)^b == a * exp(b*(x+c))
    d = 1.0 + e
    inv = pl.reciprocal(d * d, approx=approx_recip)  # 1 / (1 + exp(x+c))^2
    o_ref[...] = (num * inv).astype(o_ref.dtype)


def _default_block_bytes():
    """Per-generation target bytes of *input* tile per grid step."""
    try:
        kind = jax.devices()[0].device_kind.lower()
    except Exception:
        return 4 << 20
    if "v7" in kind:
        return 8 << 20     # 3.2 TB/s HBM: amortize the ~0.35 us per-step overhead
    if "v6" in kind:
        return 4 << 20     # fits the 32 MiB scoped-VMEM default when double-buffered
    return 2 << 20         # v5e & older: tightest scoped-VMEM default


def sigmoid_mf(x, a, b, c, *, target_block_bytes=None):
    """Apply SigmoidMF elementwise.  x: any shape, any float dtype."""
    orig_shape = x.shape
    dtype = x.dtype
    itemsize = jnp.dtype(dtype).itemsize
    if target_block_bytes is None:
        target_block_bytes = _default_block_bytes()

    xf = x.reshape(-1)
    n = xf.shape[0]

    # Pad only for truly ragged sizes (n not a multiple of 128).  The common
    # case (128-aligned activation tensors) incurs no pad and no trailing
    # slice, i.e. no extra HBM read/write passes.
    n_pad = -(-n // 128) * 128
    padded = n_pad != n
    if padded:
        xf = jnp.pad(xf, (0, n_pad - n))

    # Lane-dense last dim: largest multiple of 128 dividing n_pad while keeping
    # >= 8 rows (full sublane occupancy).  Tiny tensors (< 1024 elems) fall back
    # to lane=128 to maximize sublane usage of the single vreg tile.
    lane = None
    for cand in (8192, 4096, 2048, 1024, 512, 256, 128):
        if n_pad % cand == 0 and n_pad // cand >= 8:
            lane = cand
            break
    if lane is None:
        lane = 128
    rows = n_pad // lane
    x2d = xf.reshape(rows, lane)

    # Row-block sizing: ~target_block_bytes of input per grid step, multiple of
    # 8 rows (or all rows when there are fewer than 8).  A ragged final block is
    # handled by Pallas masking.
    if rows <= 8:
        block_rows = rows
    else:
        want = max(8, target_block_bytes // (lane * itemsize))
        block_rows = int(min((want // 8) * 8, (rows // 8) * 8))
    num_blocks = -(-rows // block_rows)

    # Megacore (v7x): avoid a single-step grid for splittable tensors so both
    # TensorCores get work on the "parallel" axis.
    if num_blocks == 1 and rows >= 16:
        block_rows = max(8, (((rows + 1) // 2) // 8) * 8)
        num_blocks = -(-rows // block_rows)

    # Double-buffered in+out tiles; raise the scoped-VMEM limit only when the
    # conservative 16 MiB default (v5e) would not cover it.  Stays well under
    # v7x's 64 MiB physical VMEM for the auto-selected block sizes.
    block_bytes = block_rows * lane * itemsize
    vmem_needed = 4 * block_bytes + (2 << 20)
    vmem_limit = max(vmem_needed, 32 << 20) if vmem_needed > (16 << 20) else None

    a_arr = jnp.asarray(a, jnp.float32).reshape(1)
    b_arr = jnp.asarray(b, jnp.float32).reshape(1)
    c_arr = jnp.asarray(c, jnp.float32).reshape(1)

    # Approx EUP reciprocal (~2^-12 rel err) is invisible at sub-f32 output
    # precision; keep the exact path for f32 outputs.
    approx_recip = itemsize < 4
    kernel = functools.partial(_sigmoid_mf_kernel, approx_recip=approx_recip)

    out2d = pl.pallas_call(
        kernel,
        out_shape=jax.ShapeDtypeStruct((rows, lane), dtype),
        grid=(num_blocks,),
        in_specs=[
            pl.BlockSpec(memory_space=pltpu.SMEM),              # a
            pl.BlockSpec(memory_space=pltpu.SMEM),              # b
            pl.BlockSpec(memory_space=pltpu.SMEM),              # c
            pl.BlockSpec((block_rows, lane), lambda i: (i, 0)),
        ],
        out_specs=pl.BlockSpec((block_rows, lane), lambda i: (i, 0)),
        compiler_params=pltpu.CompilerParams(
            dimension_semantics=("parallel",),
            vmem_limit_bytes=vmem_limit),
    )(a_arr, b_arr, c_arr, x2d)

    out = out2d.reshape(-1)
    if padded:
        out = out[:n]
    return out.reshape(orig_shape)


def _reference(x, a, b, c):
    e = jnp.exp(x + c)
    return (a * jnp.power(e, b) / (1.0 + e) ** 2).astype(x.dtype)


if __name__ == "__main__":
    key = jax.random.PRNGKey(0)
    # NCHW-style input, as the PyTorch module would typically see.
    x = jax.random.normal(key, (2, 4, 16, 16), dtype=jnp.float32)

    # Deterministic "learnable" scalar parameters (module defaults are 1, 0, 0;
    # use slightly non-trivial values so every term is exercised).
    a = jnp.float32(1.5)
    b = jnp.float32(0.7)
    c = jnp.float32(-0.25)

    y = jax.block_until_ready(sigmoid_mf(x, a, b, c))
    y_ref = _reference(x, a, b, c)
    assert y.shape == x.shape and y.dtype == x.dtype
    assert jnp.allclose(y, y_ref, atol=1e-5, rtol=1e-5), "mismatch vs reference"

    # Ragged element count: exercises the (rare) pad + slice fallback path.
    x2 = jax.random.normal(jax.random.PRNGKey(0), (3, 7, 10), dtype=jnp.float32)
    y2 = jax.block_until_ready(sigmoid_mf(x2, a, b, c))
    assert jnp.allclose(y2, _reference(x2, a, b, c), atol=1e-5, rtol=1e-5), \
        "mismatch vs reference (ragged path)"

    print("KERNEL_OK")
</pallas_src>

<mosaic_0001>
module attributes {stable_mosaic.version = 11 : i64} {
  func.func @_sigmoid_mf_kernel(%arg0: i32, %arg1: memref<1xf32, #tpu.memory_space<smem>>, %arg2: memref<1xf32, #tpu.memory_space<smem>>, %arg3: memref<1xf32, #tpu.memory_space<smem>>, %arg4: memref<8x256xf32, #tpu.memory_space<vmem>>, %arg5: memref<8x256xf32, #tpu.memory_space<vmem>>) attributes {dimension_semantics = [#tpu.dimension_semantics<parallel>], iteration_bounds = array<i64: 1>, scalar_prefetch = 0 : i64, scratch_operands = 0 : i64, tpu.core_type = #tpu.core_type<tc>, window_params = [{transform_indices = @transform_0, window_bounds = array<i64: 1>}, {transform_indices = @transform_1, window_bounds = array<i64: 1>}, {transform_indices = @transform_2, window_bounds = array<i64: 1>}, {transform_indices = @transform_3, window_bounds = array<i64: 8, 256>}, {transform_indices = @transform_4, window_bounds = array<i64: 8, 256>}]} {
    %c0 = arith.constant 0 : index
    %0 = memref.load %arg1[%c0] : memref<1xf32, #tpu.memory_space<smem>>
    %c0_0 = arith.constant 0 : index
    %1 = memref.load %arg2[%c0_0] : memref<1xf32, #tpu.memory_space<smem>>
    %c0_1 = arith.constant 0 : index
    %2 = memref.load %arg3[%c0_1] : memref<1xf32, #tpu.memory_space<smem>>
    %c0_2 = arith.constant 0 : index
    %c0_3 = arith.constant 0 : index
    %3 = vector.load %arg4[%c0_2, %c0_3] : memref<8x256xf32, #tpu.memory_space<vmem>>, vector<8x256xf32>
    %4 = vector.broadcast %2 : f32 to vector<8x256xf32>
    %5 = arith.addf %3, %4 : vector<8x256xf32>
    %6 = math.exp %5 : vector<8x256xf32>
    %7 = vector.broadcast %1 : f32 to vector<8x256xf32>
    %8 = arith.mulf %7, %5 : vector<8x256xf32>
    %9 = math.exp %8 : vector<8x256xf32>
    %10 = vector.broadcast %0 : f32 to vector<8x256xf32>
    %11 = arith.mulf %10, %9 : vector<8x256xf32>
    %cst = arith.constant 1.000000e+00 : f32
    %12 = vector.broadcast %cst : f32 to vector<8x256xf32>
    %13 = arith.addf %12, %6 : vector<8x256xf32>
    %14 = arith.mulf %13, %13 : vector<8x256xf32>
    %15 = tpu.reciprocal %14 : vector<8x256xf32> -> vector<8x256xf32>
    %16 = arith.mulf %11, %15 : vector<8x256xf32>
    %c0_4 = arith.constant 0 : index
    %c0_5 = arith.constant 0 : index
    %17 = vector.load %arg5[%c0_4, %c0_5] : memref<8x256xf32, #tpu.memory_space<vmem>>, vector<8x256xf32>
    tpu.vector_store %arg5[%c0_4, %c0_5], %16 {strides = array<i32>} : memref<8x256xf32, #tpu.memory_space<vmem>>, vector<8x256xf32>,
    return
  }
  func.func @transform_0(%arg0: i32) -> i32 {
    %c0_i32 = arith.constant 0 : i32
    %c0_i32_0 = arith.constant 0 : i32
    return %c0_i32 : i32
  }
  func.func @transform_1(%arg0: i32) -> i32 {
    %c0_i32 = arith.constant 0 : i32
    %c0_i32_0 = arith.constant 0 : i32
    return %c0_i32 : i32
  }
  func.func @transform_2(%arg0: i32) -> i32 {
    %c0_i32 = arith.constant 0 : i32
    %c0_i32_0 = arith.constant 0 : i32
    return %c0_i32 : i32
  }
  func.func @transform_3(%arg0: i32) -> (i32, i32) {
    %c0_i32 = arith.constant 0 : i32
    %c0_i32_0 = arith.constant 0 : i32
    return %arg0, %c0_i32 : i32, i32
  }
  func.func @transform_4(%arg0: i32) -> (i32, i32) {
    %c0_i32 = arith.constant 0 : i32
    %c0_i32_0 = arith.constant 0 : i32
    return %arg0, %c0_i32 : i32, i32
  }
}

</mosaic_0001>

<llo_original>
// kernel: tpu_custom_call.1
$region0: #{tpu_custom_call.1}
  #allocation0 [shape = 'u32[]', space=smem, size = 0x4, offset = 0x4, fixed_abs, tag = 'smem constant byte address 0x4 - core index']
  #allocation1 [shape = 'u32[72,128]{1,0:T(1,128)}', space=vmem, size = 0x9000, scoped, tag = 'internal scratch']
  #allocation2 [shape = 'f32[1]{0:T(128)S(6)}', space=smem, size = 0x200, scoped, tag = 'scoped memory for tpu_custom_call.1']
  #allocation3 [shape = 'f32[1]{0:T(128)S(6)}', space=smem, size = 0x200, scoped, tag = 'scoped memory for tpu_custom_call.1']
  #allocation4 [shape = 'f32[1]{0:T(128)S(6)}', space=smem, size = 0x200, scoped, tag = 'scoped memory for tpu_custom_call.1']
  %s0 = inlined_call_operand.<no memory space> [shape: f32[1], index: 0, kind: input, shape index: {}]
  %s1 = inlined_call_operand.<no memory space> [shape: f32[1], index: 1, kind: input, shape index: {}]
  %s2 = inlined_call_operand.<no memory space> [shape: f32[1], index: 2, kind: input, shape index: {}]
  %s3 = inlined_call_operand.hbm [shape: f32[8,256], index: 3, kind: input, shape index: {}]
  %s4 = inlined_call_operand.hbm [shape: f32[8,256], index: 4, kind: output, shape index: {}]
  %s5 = sld [smem:[#allocation0]]
  $region30: #{tpu_custom_call.1} parent=0
    _
  %s7 = ssub.s32 1, %s5
  %s8 = scalar_select 0, %s7, %s5
  %9 = sst [smem:[#allocation2]] %s0
  %10 = sst [smem:[#allocation3]] %s1
  %11 = sst [smem:[#allocation4]] %s2
  $region1: #{tpu_custom_call.1} parent=0
    #allocation5 [shape = 'u8[8192]{0}', space=vmem, size = 0x2000, scoped, tag = 'input window, operand 3, single buffered']
    #allocation6 [shape = 's32[1]{0}', space=sflag, size = 0x4, scoped, tag = 'scoped memory for tpu_custom_call.1']
    #allocation7 [shape = 's32[1]{0}', space=sflag, size = 0x4, scoped, tag = 'scoped memory for tpu_custom_call.1']
    #allocation8 [shape = 'u8[8192]{0}', space=vmem, size = 0x2000, scoped, tag = 'output window, operand 0, single buffered']
    %12 = vsyncpa [#allocation6], 0
    %13 = vsyncpa [#allocation7], 0
    // Predicated region
    $region2: #{tpu_custom_call.1} parent=1 // pred_check
      _
    $region3: #{tpu_custom_call.1} parent=1 // pred_check_branch
      %15 = sbr.rel (0) target = $region5
    $region4: #{tpu_custom_call.1} parent=1 // pred_region
      _
    $region5: #{tpu_custom_call.1} parent=1 // pred_fallthru
      _
    // Predicated region
    $region6: #{tpu_custom_call.1} parent=1 // pred_check
      _
    $region7: #{tpu_custom_call.1} parent=1 // pred_check_branch
      %17 = sbr.rel (0) target = $region9
    $region8: #{tpu_custom_call.1} parent=1 // pred_region
      _
    $region9: #{tpu_custom_call.1} parent=1 // pred_fallthru
      _
    // Predicated region
    $region10: #{tpu_custom_call.1} parent=1 // pred_check
      _
    $region11: #{tpu_custom_call.1} parent=1 // pred_check_branch
      %19 = sbr.rel (0) target = $region13
    $region12: #{tpu_custom_call.1} parent=1 // pred_region
      _
    $region13: #{tpu_custom_call.1} parent=1 // pred_fallthru
      _
    // Predicated region
    $region14: #{tpu_custom_call.1} parent=1 // pred_check
      _
    $region15: #{tpu_custom_call.1} parent=1 // pred_check_branch
      %21 = sbr.rel (0) target = $region17
    $region16: #{tpu_custom_call.1} parent=1 // pred_region
      %23 = vsyncadd [#allocation6], 0
      %s25 = sshll.u32 %s3, 4
      %s26 = int_to_ptr.hbm [resolvable:$true] %s25
      %s27 = sshll.u32 [#allocation5], 4
      %s28 = int_to_ptr.vmem [resolvable:$true] %s27
      %30 = dma.hbm_to_vmem [thread:$0]  %s26, 256, %s28, [#allocation6]
    $region17: #{tpu_custom_call.1} parent=1 // pred_fallthru
      _
    // Predicated region
    $region18: #{tpu_custom_call.1} parent=1 // pred_check
      _
    $region19: #{tpu_custom_call.1} parent=1 // pred_check_branch
      %32 = sbr.rel (0) target = $region21
    $region20: #{tpu_custom_call.1} parent=1 // pred_region
      %34 = dma.done [#allocation6], 256
    $region21: #{tpu_custom_call.1} parent=1 // pred_fallthru
      _
    %s35 = sld [smem:[#allocation2]]
    %s36 = sld [smem:[#allocation3]]
    %s37 = sld [smem:[#allocation4]]
    %v38 = vld [vmem:[#allocation5] sm:$0xff]
    %v39 = vld [vmem:[#allocation5 + $0x8] sm:$0xff]
    %v40 = vstv %s37
    %v41 = vadd.f32 %v38, %v40
    %v42 = vadd.f32 %v39, %v40
    %v43 = vmul.f32 %v41, 1.442695
    %v44 = vpow.pop %v43
    %v45 = vmul.f32 %v42, 1.442695
    %v46 = vpow.pop %v45
    %v47 = vstv %s36
    %v48 = vmul.f32 %v47, %v41
    %v49 = vmul.f32 %v47, %v42
    %v50 = vmul.f32 %v48, 1.442695
    %v51 = vpow.pop %v50
    %v52 = vmul.f32 %v49, 1.442695
    %v53 = vpow.pop %v52
    %v54 = vstv %s35
    %v55 = vmul.f32 %v54, %v51
    %v56 = vmul.f32 %v54, %v53
    %v57 = vadd.f32 %v44, 1.0
    %v58 = vadd.f32 %v46, 1.0
    %v59 = vmul.f32 %v57, %v57
    %v60 = vmul.f32 %v58, %v58
    %v61 = vrcp.pop %v59
    %v62 = vmul.f32 %v59, %v61
    %v63 = vsub.f32 1.0, %v62
    %v64 = vmul.f32 %v61, %v63
    %v65 = vadd.f32 %v61, %v64
    %vm66 = vweird.f32 %v59
    %vm67 = vweird.f32 %v61
    %vm68 = vmor %vm66, %vm67
    %v69 = vsel %vm68, %v61, %v65
    %v70 = vand.u32 2147483647, %v59
    %vm71 = vcmp.eq.f32.partialorder %v70, 8.507059e+37
    %v72 = vand.u32 %v59, 2147483648
    %v73 = vor.u32 1.1754944e-38, %v72
    %v74 = vsel %vm71, %v73, %v69
    %v75 = vrcp.pop %v60
    %v76 = vmul.f32 %v60, %v75
    %v77 = vsub.f32 1.0, %v76
    %v78 = vmul.f32 %v75, %v77
    %v79 = vadd.f32 %v75, %v78
    %vm80 = vweird.f32 %v60
    %vm81 = vweird.f32 %v75
    %vm82 = vmor %vm80, %vm81
    %v83 = vsel %vm82, %v75, %v79
    %v84 = vand.u32 2147483647, %v60
    %vm85 = vcmp.eq.f32.partialorder %v84, 8.507059e+37
    %v86 = vand.u32 %v60, 2147483648
    %v87 = vor.u32 1.1754944e-38, %v86
    %v88 = vsel %vm85, %v87, %v83
    %v89 = vmul.f32 %v55, %v74
    %v90 = vmul.f32 %v56, %v88
    %91 = vst [vmem:[#allocation8] sm:$0xff] %v89
    %92 = vst [vmem:[#allocation8 + $0x8] sm:$0xff] %v90
    // Predicated region
    $region22: #{tpu_custom_call.1} parent=1 // pred_check
      _
    $region23: #{tpu_custom_call.1} parent=1 // pred_check_branch
      %94 = sbr.rel (0) target = $region25
    $region24: #{tpu_custom_call.1} parent=1 // pred_region
      %96 = vsyncadd [#allocation7], 0
      %s98 = sshll.u32 [#allocation8], 4
      %s99 = int_to_ptr.vmem [resolvable:$true] %s98
      %s100 = sshll.u32 %s4, 4
      %s101 = int_to_ptr.hbm [resolvable:$true] %s100
      %103 = dma.vmem_to_hbm [thread:$0]  %s99, 256, %s101, [#allocation7]
    $region25: #{tpu_custom_call.1} parent=1 // pred_fallthru
      _
    // Predicated region
    $region26: #{tpu_custom_call.1} parent=1 // pred_check
      _
    $region27: #{tpu_custom_call.1} parent=1 // pred_check_branch
      %105 = sbr.rel (0) target = $region29
    $region28: #{tpu_custom_call.1} parent=1 // pred_region
      %107 = dma.done [#allocation7], 256
    $region29: #{tpu_custom_call.1} parent=1 // pred_fallthru
      _
    %108 = vsyncpa [#allocation6], 1
    %109 = vsyncpa [#allocation7], 1

</llo_original>
